<compile_context>
chip_gen: v6e
topology: v6e:2x2x1
jax: 0.10.0
libtpu: 0.0.40
codegen_flags: <defaults>
</compile_context>

<pallas_src>
import jax
import jax.numpy as jnp
from jax.experimental import pallas as pl
from jax.experimental.pallas import tpu as pltpu

_LANE = 128
# Row-tile granularity: 32 covers the packed sublane tile for every input
# dtype we accept (int8/uint8: 32, bf16: 16, f32: 8) and the bf16 output.
_ROW_TILE_G = 32
_TM_CAP = 1024


def _round_up(n, m):
    return -(-n // m) * m


def _ram_dqn_kernel(x_ref, w1_ref, b1_ref, w2_ref, b2_ref, w3_ref, b3_ref, o_ref):
    x = x_ref[...]
    if jnp.issubdtype(x.dtype, jnp.integer):
        # RAM bytes 0..255: zero-extend to i32, then f32 (exact), then bf16
        # (also exact for 0..255).  Keeps the HBM side at 1 byte/element.
        x = x.astype(jnp.int32).astype(jnp.float32)
    x = x.astype(jnp.bfloat16)
    # Layer 1: (tm, D) @ (D, 256) + (1, 256) -> ReLU   (f32 accumulation)
    h1 = jnp.dot(x, w1_ref[...], preferred_element_type=jnp.float32)
    h1 = jnp.maximum(h1 + b1_ref[...], 0.0).astype(jnp.bfloat16)
    # Layer 2: (tm, 256) @ (256, 256) + (1, 256) -> ReLU
    h2 = jnp.dot(h1, w2_ref[...], preferred_element_type=jnp.float32)
    h2 = jnp.maximum(h2 + b2_ref[...], 0.0).astype(jnp.bfloat16)
    # Output layer: (tm, 256) @ (256, A_pad) + (1, A_pad); lane-dense bf16 store.
    q = jnp.dot(h2, w3_ref[...], preferred_element_type=jnp.float32)
    o_ref[...] = (q + b3_ref[...]).astype(o_ref.dtype)


def _pick_tm(B):
    """Row tile: big (amortize ~0.35us/step), multiple of 32, and split into
    >= 2 grid steps when the whole batch would otherwise be one step so the
    'parallel' axis can shard across both v7x TensorCores (no-op on 1-TC
    v5e/v6e)."""
    tm = min(_TM_CAP, _round_up(B, _ROW_TILE_G))
    if pl.cdiv(B, tm) < 2 and B > _ROW_TILE_G:
        tm = _round_up(pl.cdiv(B, 2), _ROW_TILE_G)
    return tm


def _mlp_pallas(x2d, col_block, in_dim, params):
    """x2d: (B, W) slab in its native dtype; the kernel reads column block
    `col_block` of width `in_dim` from each row tile (W == in_dim,
    col_block == 0 for the plain 2-D path; W == C*in_dim, col_block == C-1 for
    the fused frame-stack-select path)."""
    B = x2d.shape[0]
    w1, b1, w2, b2, w3, b3 = params
    a_pad = w3.shape[1]

    tm = _pick_tm(B)
    grid = (pl.cdiv(B, tm),)

    # Weights/biases: full-array blocks with a constant index_map -> stay
    # VMEM-resident across all grid steps.
    const = lambda arr: pl.BlockSpec(arr.shape, lambda i: (0, 0))

    return pl.pallas_call(
        _ram_dqn_kernel,
        out_shape=jax.ShapeDtypeStruct((B, a_pad), jnp.bfloat16),
        grid_spec=pltpu.PrefetchScalarGridSpec(
            num_scalar_prefetch=0,
            grid=grid,
            in_specs=[
                pl.BlockSpec((tm, in_dim), lambda i: (i, col_block)),
                const(w1), const(b1), const(w2), const(b2), const(w3), const(b3),
            ],
            out_specs=pl.BlockSpec((tm, a_pad), lambda i: (i, 0)),
        ),
        compiler_params=pltpu.CompilerParams(
            dimension_semantics=("parallel",),  # batch rows are independent
        ),
    )(x2d, w1, b1, w2, b2, w3, b3)


def ram_dqn_forward(x, params, action_dim, state=None):
    """Mapping: x -> (Q(x, *), state).  Mirrors RamDQN.forward.

    x is passed to the kernel in its native dtype (uint8 RAM bytes are the
    intended fast path).  Q is returned as bf16 (exact enough for argmax
    action selection); cast to f32 downstream if needed.
    """
    x = jnp.asarray(x)  # keep native dtype -- no forced f32 upcast pass
    if x.ndim == 3 and x.shape[1] == 4:
        B, C, D = x.shape
        if D % _LANE == 0:
            # Fused frame-stack selection: view x as (B, C*D) (free reshape of
            # a contiguous array) and DMA only the last-frame column block
            # inside the kernel -- no x[:, -1, :] HBM copy.
            x2d, col_block, in_dim = x.reshape(B, C * D), C - 1, D
        else:
            x2d, col_block, in_dim = x[:, -1, :], 0, D
    else:
        x2d = x.reshape(x.shape[0], -1)
        col_block, in_dim = 0, x2d.shape[1]
    q = _mlp_pallas(x2d, col_block, in_dim, params)
    return q[:, :action_dim], state


def init_params(key, input_dim, hidden_sizes, action_dim):
    """torch nn.Linear-style U(-1/sqrt(fan_in), .) init.

    Weights are stored (in, out) -- the transpose of torch's (out, in) -- in
    bfloat16 (the kernel accumulates in f32).  The output layer is zero-padded
    to a lane-dense width (multiple of 128) so the last matmul and the output
    store are unmasked; the wrapper slices Q back to `action_dim`.
    Biases are (1, H) float32.
    """
    dims = [input_dim, *hidden_sizes, action_dim]
    a_pad = _round_up(max(action_dim, 1), _LANE)
    params = []
    for i in range(len(dims) - 1):
        fan_in, fan_out = dims[i], dims[i + 1]
        key, kw, kb = jax.random.split(key, 3)
        bound = float(fan_in) ** -0.5
        w = jax.random.uniform(kw, (fan_in, fan_out), jnp.float32, -bound, bound)
        b = jax.random.uniform(kb, (1, fan_out), jnp.float32, -bound, bound)
        if i == len(dims) - 2:  # output layer: pad columns with zeros
            w = jnp.pad(w, ((0, 0), (0, a_pad - fan_out)))
            b = jnp.pad(b, ((0, 0), (0, a_pad - fan_out)))
        params.extend([w.astype(jnp.bfloat16), b])
    return tuple(params)


def _reference_forward(x, params, action_dim):
    """Pure-JAX reference mirroring the kernel's bf16/f32 mixed precision."""
    x = jnp.asarray(x)
    if x.ndim == 3 and x.shape[1] == 4:
        x = x[:, -1, :]
    x = x.reshape(x.shape[0], -1)
    w1, b1, w2, b2, w3, b3 = params
    h = x.astype(jnp.float32).astype(jnp.bfloat16)
    h = jnp.maximum(jnp.dot(h, w1, preferred_element_type=jnp.float32) + b1, 0.0)
    h = h.astype(jnp.bfloat16)
    h = jnp.maximum(jnp.dot(h, w2, preferred_element_type=jnp.float32) + b2, 0.0)
    h = h.astype(jnp.bfloat16)
    q = (jnp.dot(h, w3, preferred_element_type=jnp.float32) + b3).astype(jnp.bfloat16)
    return q[:, :action_dim]


if __name__ == "__main__":
    key = jax.random.PRNGKey(0)

    # Atari-RAM-like shapes: 128-byte RAM state (uint8), 4-deep frame stack,
    # 6 actions, default hidden_sizes=(256, 256).  B=64 keeps the smoke test
    # small while exercising a 2-step parallel grid (tm=32).
    B, C, D = 64, 4, 128
    hidden_sizes = (256, 256)
    A = 6

    k_x, k_p = jax.random.split(key)
    x = jax.random.randint(k_x, (B, C, D), 0, 256, dtype=jnp.int32).astype(jnp.uint8)
    params = init_params(k_p, D, hidden_sizes, A)

    q, state = ram_dqn_forward(x, params, A, state=None)
    q = jax.block_until_ready(q)

    q_ref = _reference_forward(x, params, A)
    assert q.shape == (B, A)
    assert q.dtype == jnp.bfloat16
    assert state is None
    assert jnp.allclose(q.astype(jnp.float32), q_ref.astype(jnp.float32),
                        rtol=2e-2, atol=2e-1), float(
        jnp.max(jnp.abs(q.astype(jnp.float32) - q_ref.astype(jnp.float32))))

    print("KERNEL_OK")
</pallas_src>

<mosaic_0001>
module attributes {stable_mosaic.version = 11 : i64} {
  func.func @_ram_dqn_kernel(%arg0: i32, %arg1: memref<32x128xi8, #tpu.memory_space<vmem>>, %arg2: memref<128x256xbf16, #tpu.memory_space<vmem>>, %arg3: memref<1x256xf32, #tpu.memory_space<vmem>>, %arg4: memref<256x256xbf16, #tpu.memory_space<vmem>>, %arg5: memref<1x256xf32, #tpu.memory_space<vmem>>, %arg6: memref<256x128xbf16, #tpu.memory_space<vmem>>, %arg7: memref<1x128xf32, #tpu.memory_space<vmem>>, %arg8: memref<32x128xbf16, #tpu.memory_space<vmem>>) attributes {dimension_semantics = [#tpu.dimension_semantics<parallel>], iteration_bounds = array<i64: 2>, scalar_prefetch = 0 : i64, scratch_operands = 0 : i64, tpu.core_type = #tpu.core_type<tc>, window_params = [{transform_indices = @transform_0, window_bounds = array<i64: 32, 128>}, {pipeline_mode = #tpu.pipeline_mode<synchronous>, transform_indices = @transform_1, window_bounds = array<i64: 128, 256>}, {pipeline_mode = #tpu.pipeline_mode<synchronous>, transform_indices = @transform_2, window_bounds = array<i64: 1, 256>}, {pipeline_mode = #tpu.pipeline_mode<synchronous>, transform_indices = @transform_3, window_bounds = array<i64: 256, 256>}, {pipeline_mode = #tpu.pipeline_mode<synchronous>, transform_indices = @transform_4, window_bounds = array<i64: 1, 256>}, {pipeline_mode = #tpu.pipeline_mode<synchronous>, transform_indices = @transform_5, window_bounds = array<i64: 256, 128>}, {pipeline_mode = #tpu.pipeline_mode<synchronous>, transform_indices = @transform_6, window_bounds = array<i64: 1, 128>}, {transform_indices = @transform_7, window_bounds = array<i64: 32, 128>}]} {
    %c0 = arith.constant 0 : index
    %c0_0 = arith.constant 0 : index
    %0 = vector.load %arg1[%c0, %c0_0] : memref<32x128xi8, #tpu.memory_space<vmem>>, vector<32x128xi8>
    %1 = arith.extui %0 : vector<32x128xi8> to vector<32x128xi32>
    %2 = arith.sitofp %1 : vector<32x128xi32> to vector<32x128xf32>
    %3 = arith.truncf %2 : vector<32x128xf32> to vector<32x128xbf16>
    %c0_1 = arith.constant 0 : index
    %c0_2 = arith.constant 0 : index
    %4 = vector.load %arg2[%c0_1, %c0_2] : memref<128x256xbf16, #tpu.memory_space<vmem>>, vector<128x256xbf16>
    %cst = arith.constant dense<0.000000e+00> : vector<32x256xf32>
    %5 = tpu.matmul %3, %4, %cst {dimension_numbers = #tpu.dot_dimension_numbers<[1], [0], [0], [1], [0, 0, 1, 1], [], []>} : vector<32x128xbf16>, vector<128x256xbf16>, vector<32x256xf32> -> vector<32x256xf32>
    %c0_3 = arith.constant 0 : index
    %c0_4 = arith.constant 0 : index
    %6 = vector.load %arg3[%c0_3, %c0_4] : memref<1x256xf32, #tpu.memory_space<vmem>>, vector<1x256xf32>
    %7 = vector.broadcast %6 : vector<1x256xf32> to vector<32x256xf32>
    %8 = arith.addf %5, %7 : vector<32x256xf32>
    %cst_5 = arith.constant 0.000000e+00 : f32
    %9 = vector.broadcast %cst_5 : f32 to vector<32x256xf32>
    %10 = arith.maximumf %8, %9 : vector<32x256xf32>
    %11 = arith.truncf %10 : vector<32x256xf32> to vector<32x256xbf16>
    %c0_6 = arith.constant 0 : index
    %c0_7 = arith.constant 0 : index
    %12 = vector.load %arg4[%c0_6, %c0_7] : memref<256x256xbf16, #tpu.memory_space<vmem>>, vector<256x256xbf16>
    %cst_8 = arith.constant dense<0.000000e+00> : vector<32x256xf32>
    %13 = tpu.matmul %11, %12, %cst_8 {dimension_numbers = #tpu.dot_dimension_numbers<[1], [0], [0], [1], [0, 0, 1, 1], [], []>} : vector<32x256xbf16>, vector<256x256xbf16>, vector<32x256xf32> -> vector<32x256xf32>
    %c0_9 = arith.constant 0 : index
    %c0_10 = arith.constant 0 : index
    %14 = vector.load %arg5[%c0_9, %c0_10] : memref<1x256xf32, #tpu.memory_space<vmem>>, vector<1x256xf32>
    %15 = vector.broadcast %14 : vector<1x256xf32> to vector<32x256xf32>
    %16 = arith.addf %13, %15 : vector<32x256xf32>
    %cst_11 = arith.constant 0.000000e+00 : f32
    %17 = vector.broadcast %cst_11 : f32 to vector<32x256xf32>
    %18 = arith.maximumf %16, %17 : vector<32x256xf32>
    %19 = arith.truncf %18 : vector<32x256xf32> to vector<32x256xbf16>
    %c0_12 = arith.constant 0 : index
    %c0_13 = arith.constant 0 : index
    %20 = vector.load %arg6[%c0_12, %c0_13] : memref<256x128xbf16, #tpu.memory_space<vmem>>, vector<256x128xbf16>
    %cst_14 = arith.constant dense<0.000000e+00> : vector<32x128xf32>
    %21 = tpu.matmul %19, %20, %cst_14 {dimension_numbers = #tpu.dot_dimension_numbers<[1], [0], [0], [1], [0, 0, 1, 1], [], []>} : vector<32x256xbf16>, vector<256x128xbf16>, vector<32x128xf32> -> vector<32x128xf32>
    %c0_15 = arith.constant 0 : index
    %c0_16 = arith.constant 0 : index
    %22 = vector.load %arg7[%c0_15, %c0_16] : memref<1x128xf32, #tpu.memory_space<vmem>>, vector<1x128xf32>
    %23 = vector.broadcast %22 : vector<1x128xf32> to vector<32x128xf32>
    %24 = arith.addf %21, %23 : vector<32x128xf32>
    %25 = arith.truncf %24 : vector<32x128xf32> to vector<32x128xbf16>
    %c0_17 = arith.constant 0 : index
    %c0_18 = arith.constant 0 : index
    %26 = vector.load %arg8[%c0_17, %c0_18] : memref<32x128xbf16, #tpu.memory_space<vmem>>, vector<32x128xbf16>
    tpu.vector_store %arg8[%c0_17, %c0_18], %25 {strides = array<i32>} : memref<32x128xbf16, #tpu.memory_space<vmem>>, vector<32x128xbf16>,
    return
  }
  func.func @transform_0(%arg0: i32) -> (i32, i32) {
    %c3_i32 = arith.constant 3 : i32
    %c0_i32 = arith.constant 0 : i32
    return %arg0, %c3_i32 : i32, i32
  }
  func.func @transform_1(%arg0: i32) -> (i32, i32) {
    %c0_i32 = arith.constant 0 : i32
    %c0_i32_0 = arith.constant 0 : i32
    %c0_i32_1 = arith.constant 0 : i32
    return %c0_i32, %c0_i32_0 : i32, i32
  }
  func.func @transform_2(%arg0: i32) -> (i32, i32) {
    %c0_i32 = arith.constant 0 : i32
    %c0_i32_0 = arith.constant 0 : i32
    %c0_i32_1 = arith.constant 0 : i32
    return %c0_i32, %c0_i32_0 : i32, i32
  }
  func.func @transform_3(%arg0: i32) -> (i32, i32) {
    %c0_i32 = arith.constant 0 : i32
    %c0_i32_0 = arith.constant 0 : i32
    %c0_i32_1 = arith.constant 0 : i32
    return %c0_i32, %c0_i32_0 : i32, i32
  }
  func.func @transform_4(%arg0: i32) -> (i32, i32) {
    %c0_i32 = arith.constant 0 : i32
    %c0_i32_0 = arith.constant 0 : i32
    %c0_i32_1 = arith.constant 0 : i32
    return %c0_i32, %c0_i32_0 : i32, i32
  }
  func.func @transform_5(%arg0: i32) -> (i32, i32) {
    %c0_i32 = arith.constant 0 : i32
    %c0_i32_0 = arith.constant 0 : i32
    %c0_i32_1 = arith.constant 0 : i32
    return %c0_i32, %c0_i32_0 : i32, i32
  }
  func.func @transform_6(%arg0: i32) -> (i32, i32) {
    %c0_i32 = arith.constant 0 : i32
    %c0_i32_0 = arith.constant 0 : i32
    %c0_i32_1 = arith.constant 0 : i32
    return %c0_i32, %c0_i32_0 : i32, i32
  }
  func.func @transform_7(%arg0: i32) -> (i32, i32) {
    %c0_i32 = arith.constant 0 : i32
    %c0_i32_0 = arith.constant 0 : i32
    return %arg0, %c0_i32 : i32, i32
  }
}

</mosaic_0001>

<llo_original>
// kernel: tpu_custom_call.1
$region0: #{tpu_custom_call.1}
  #allocation0 [shape = 'u32[]', space=smem, size = 0x4, offset = 0x4, fixed_abs, tag = 'smem constant byte address 0x4 - core index']
  #allocation1 [shape = 'u32[144,128]{1,0:T(1,128)}', space=vmem, size = 0x12000, scoped, tag = 'internal scratch']
  %s0 = inlined_call_operand.hbm [shape: u8[64,512], index: 0, kind: input, shape index: {}]
  %s1 = inlined_call_operand.hbm [shape: bf16[128,256], index: 1, kind: input, shape index: {}]
  %s2 = inlined_call_operand.vmem [shape: f32[1,256], index: 2, kind: input, shape index: {}]
  %s3 = inlined_call_operand.hbm [shape: bf16[256,256], index: 3, kind: input, shape index: {}]
  %s4 = inlined_call_operand.vmem [shape: f32[1,256], index: 4, kind: input, shape index: {}]
  %s5 = inlined_call_operand.hbm [shape: bf16[256,128], index: 5, kind: input, shape index: {}]
  %s6 = inlined_call_operand.vmem [shape: f32[1,128], index: 6, kind: input, shape index: {}]
  %s7 = inlined_call_operand.hbm [shape: bf16[64,128], index: 7, kind: output, shape index: {}]
  %s8 = sld [smem:[#allocation0]]
  $region77: #{tpu_custom_call.1} parent=0
    _
  %s10 = ssub.s32 1, %s8
  %s11 = scalar_select 0, %s10, %s8
  $region1: #{tpu_custom_call.1} parent=0
    #allocation2 [shape = 'u8[8192]{0}', space=vmem, size = 0x2000, scoped, tag = 'input window, operand 0']
    #allocation3 [shape = 's32[2]{0}', space=sflag, size = 0x8, scoped, tag = 'scoped memory for tpu_custom_call.1']
    #allocation4 [shape = 's32[2]{0}', space=sflag, size = 0x8, scoped, tag = 'scoped memory for tpu_custom_call.1']
    #allocation5 [shape = 'u8[65536]{0}', space=vmem, size = 0x10000, scoped, tag = 'input window, operand 1, single buffered']
    #allocation6 [shape = 's32[1]{0}', space=sflag, size = 0x4, scoped, tag = 'scoped memory for tpu_custom_call.1']
    #allocation7 [shape = 'u8[131072]{0}', space=vmem, size = 0x20000, scoped, tag = 'input window, operand 3, single buffered']
    #allocation8 [shape = 'u8[65536]{0}', space=vmem, size = 0x10000, scoped, tag = 'input window, operand 5, single buffered']
    #allocation9 [shape = 's32[1]{0}', space=sflag, size = 0x4, scoped, tag = 'scoped memory for tpu_custom_call.1']
    #allocation10 [shape = 'u8[16384]{0}', space=vmem, size = 0x4000, scoped, tag = 'output window, operand 0']
    %12 = vsyncpa [#allocation3], 0
    %s13 = scalar_lea.sflag [#allocation3], 1
    %14 = vsyncpa %s13, 0
    %15 = vsyncpa [#allocation6], 0
    %16 = vsyncpa [#allocation9], 0
    %17 = vsyncpa [#allocation4], 0
    %s18 = scalar_lea.sflag [#allocation4], 1
    %19 = vsyncpa %s18, 0
    loop: start=0, step=1, limit=4
    $region2: #{tpu_custom_call.1} parent=1 // loop_pre_header
      _
    $region3: #{tpu_custom_call.1} parent=1 // loop_header
      %s21 = sphi 0, %s25
      %p22 = scmp.ge.s32.totalorder %s21, 4
      %s31 = sphi 0, %s33
      %s34 = sphi 0, %s31
      %s35 = sphi 0, %s34
      %s51 = sphi 0, %s35
      %s55 = sphi 0, %s55
      %s57 = sphi 0, %s55
      %s58 = sphi 0, %s57
      %s72 = sphi 0, %s58
      %s76 = sphi 0, %s76
      %s78 = sphi 0, %s76
      %s79 = sphi 0, %s78
      %s93 = sphi 0, %s79
      %s97 = sphi 0, %s97
      %s99 = sphi 0, %s97
      %s100 = sphi 0, %s99
      %s114 = sphi 0, %s100
      %s118 = sphi 0, %s118
      %s120 = sphi 0, %s118
      %s121 = sphi 0, %s120
      %s135 = sphi 0, %s121
      %s139 = sphi 0, %s139
      %s141 = sphi 0, %s139
      %s142 = sphi 0, %s141
      %s156 = sphi 0, %s142
      %s160 = sphi 0, %s160
      %s162 = sphi 0, %s160
      %s163 = sphi 0, %s162
      %s177 = sphi 0, %s163
      %s183 = sphi 0, %s185
      %s186 = sphi 0, %s183
      %s187 = sphi 0, %s186
      %s203 = sphi 0, %s187
    $region4: #{tpu_custom_call.1} parent=1 // loop_header_branch
      %24 = sbr.rel (%p22) target = $region8
    $region5: #{tpu_custom_call.1} parent=1 // loop_body
      %s26 = ssub.s32 %s21, 1
      %s27 = ssub.s32 %s21, 2
      %s28 = sadd.s32 %s21, 1
      %s29 = ssub.s32 %s21, %s28
      %p30 = scmp.eq.s32.totalorder %s29, 0
      %s32 = sadd.s32 %s31, 1
      %s33 = scalar_select %p30, %s31, %s32
      %p36 = pneg %p30
      %p37 = scmp.eq.s32.totalorder %s21, 1
      %p38 = por %p36, %p37
      %p39 = scmp.ne.s32.totalorder %s31, %s34
      %p40 = scmp.eq.s32.totalorder %s21, 0
      %p41 = por %p39, %p40
      %p42 = scmp.ne.s32.totalorder %s31, %s34
      %p43 = scmp.eq.s32.totalorder %s26, 1
      %p44 = por %p42, %p43
      %p45 = scmp.ne.s32.totalorder %s34, %s35
      %p46 = scmp.eq.s32.totalorder %s26, 0
      %p47 = por %p45, %p46
      %p48 = scmp.ne.s32.totalorder %s34, %s35
      %p49 = scmp.eq.s32.totalorder %s27, 1
      %p50 = por %p48, %p49
      %p52 = scmp.ne.s32.totalorder %s35, %s51
      %p53 = scmp.eq.s32.totalorder %s27, 0
      %p54 = por %p52, %p53
      %s56 = sadd.s32 %s55, 1
      %p59 = scmp.eq.s32.totalorder %s21, 1
      %p60 = scmp.ne.s32.totalorder %s55, %s57
      %p61 = scmp.eq.s32.totalorder %s21, 0
      %p62 = por %p60, %p61
      %p63 = scmp.ne.s32.totalorder %s55, %s57
      %p64 = scmp.eq.s32.totalorder %s26, 1
      %p65 = por %p63, %p64
      %p66 = scmp.ne.s32.totalorder %s57, %s58
      %p67 = scmp.eq.s32.totalorder %s26, 0
      %p68 = por %p66, %p67
      %p69 = scmp.ne.s32.totalorder %s57, %s58
      %p70 = scmp.eq.s32.totalorder %s27, 1
      %p71 = por %p69, %p70
      %p73 = scmp.ne.s32.totalorder %s58, %s72
      %p74 = scmp.eq.s32.totalorder %s27, 0
      %p75 = por %p73, %p74
      %s77 = sadd.s32 %s76, 1
      %p80 = scmp.eq.s32.totalorder %s21, 1
      %p81 = scmp.ne.s32.totalorder %s76, %s78
      %p82 = scmp.eq.s32.totalorder %s21, 0
      %p83 = por %p81, %p82
      %p84 = scmp.ne.s32.totalorder %s76, %s78
      %p85 = scmp.eq.s32.totalorder %s26, 1
      %p86 = por %p84, %p85
      %p87 = scmp.ne.s32.totalorder %s78, %s79
      %p88 = scmp.eq.s32.totalorder %s26, 0
      %p89 = por %p87, %p88
      %p90 = scmp.ne.s32.totalorder %s78, %s79
      %p91 = scmp.eq.s32.totalorder %s27, 1
      %p92 = por %p90, %p91
      %p94 = scmp.ne.s32.totalorder %s79, %s93
      %p95 = scmp.eq.s32.totalorder %s27, 0
      %p96 = por %p94, %p95
      %s98 = sadd.s32 %s97, 1
      %p101 = scmp.eq.s32.totalorder %s21, 1
      %p102 = scmp.ne.s32.totalorder %s97, %s99
      %p103 = scmp.eq.s32.totalorder %s21, 0
      %p104 = por %p102, %p103
      %p105 = scmp.ne.s32.totalorder %s97, %s99
      %p106 = scmp.eq.s32.totalorder %s26, 1
      %p107 = por %p105, %p106
      %p108 = scmp.ne.s32.totalorder %s99, %s100
      %p109 = scmp.eq.s32.totalorder %s26, 0
      %p110 = por %p108, %p109
      %p111 = scmp.ne.s32.totalorder %s99, %s100
      %p112 = scmp.eq.s32.totalorder %s27, 1
      %p113 = por %p111, %p112
      %p115 = scmp.ne.s32.totalorder %s100, %s114
      %p116 = scmp.eq.s32.totalorder %s27, 0
      %p117 = por %p115, %p116
      %s119 = sadd.s32 %s118, 1
      %p122 = scmp.eq.s32.totalorder %s21, 1
      %p123 = scmp.ne.s32.totalorder %s118, %s120
      %p124 = scmp.eq.s32.totalorder %s21, 0
      %p125 = por %p123, %p124
      %p126 = scmp.ne.s32.totalorder %s118, %s120
      %p127 = scmp.eq.s32.totalorder %s26, 1
      %p128 = por %p126, %p127
      %p129 = scmp.ne.s32.totalorder %s120, %s121
      %p130 = scmp.eq.s32.totalorder %s26, 0
      %p131 = por %p129, %p130
      %p132 = scmp.ne.s32.totalorder %s120, %s121
      %p133 = scmp.eq.s32.totalorder %s27, 1
      %p134 = por %p132, %p133
      %p136 = scmp.ne.s32.totalorder %s121, %s135
      %p137 = scmp.eq.s32.totalorder %s27, 0
      %p138 = por %p136, %p137
      %s140 = sadd.s32 %s139, 1
      %p143 = scmp.eq.s32.totalorder %s21, 1
      %p144 = scmp.ne.s32.totalorder %s139, %s141
      %p145 = scmp.eq.s32.totalorder %s21, 0
      %p146 = por %p144, %p145
      %p147 = scmp.ne.s32.totalorder %s139, %s141
      %p148 = scmp.eq.s32.totalorder %s26, 1
      %p149 = por %p147, %p148
      %p150 = scmp.ne.s32.totalorder %s141, %s142
      %p151 = scmp.eq.s32.totalorder %s26, 0
      %p152 = por %p150, %p151
      %p153 = scmp.ne.s32.totalorder %s141, %s142
      %p154 = scmp.eq.s32.totalorder %s27, 1
      %p155 = por %p153, %p154
      %p157 = scmp.ne.s32.totalorder %s142, %s156
      %p158 = scmp.eq.s32.totalorder %s27, 0
      %p159 = por %p157, %p158
      %s161 = sadd.s32 %s160, 1
      %p164 = scmp.eq.s32.totalorder %s21, 1
      %p165 = scmp.ne.s32.totalorder %s160, %s162
      %p166 = scmp.eq.s32.totalorder %s21, 0
      %p167 = por %p165, %p166
      %p168 = scmp.ne.s32.totalorder %s160, %s162
      %p169 = scmp.eq.s32.totalorder %s26, 1
      %p170 = por %p168, %p169
      %p171 = scmp.ne.s32.totalorder %s162, %s163
      %p172 = scmp.eq.s32.totalorder %s26, 0
      %p173 = por %p171, %p172
      %p174 = scmp.ne.s32.totalorder %s162, %s163
      %p175 = scmp.eq.s32.totalorder %s27, 1
      %p176 = por %p174, %p175
      %p178 = scmp.ne.s32.totalorder %s163, %s177
      %p179 = scmp.eq.s32.totalorder %s27, 0
      %p180 = por %p178, %p179
      %s181 = ssub.s32 %s21, %s28
      %p182 = scmp.eq.s32.totalorder %s181, 0
      %s184 = sadd.s32 %s183, 1
      %s185 = scalar_select %p182, %s183, %s184
      %p188 = pneg %p182
      %p189 = scmp.eq.s32.totalorder %s21, 1
      %p190 = por %p188, %p189
      %p191 = scmp.ne.s32.totalorder %s183, %s186
      %p192 = scmp.eq.s32.totalorder %s21, 0
      %p193 = por %p191, %p192
      %p194 = scmp.ne.s32.totalorder %s183, %s186
      %p195 = scmp.eq.s32.totalorder %s26, 1
      %p196 = por %p194, %p195
      %p197 = scmp.ne.s32.totalorder %s186, %s187
      %p198 = scmp.eq.s32.totalorder %s26, 0
      %p199 = por %p197, %p198
      %p200 = scmp.ne.s32.totalorder %s186, %s187
      %p201 = scmp.eq.s32.totalorder %s27, 1
      %p202 = por %p200, %p201
      %p204 = scmp.ne.s32.totalorder %s187, %s203
      %p205 = scmp.eq.s32.totalorder %s27, 0
      %p206 = por %p204, %p205
      %p207 = scmp.le.s32.totalorder 1, %s21
      %p208 = scmp.lt.s32.totalorder %s21, 3
      %p209 = pnand %p207, %p208
      %p210 = pneg %p209
      // Predicated region
      $region9: #{tpu_custom_call.1} parent=5 // pred_check
        _
      $region10: #{tpu_custom_call.1} parent=5 // pred_check_branch
        %212 = sbr.rel (%p209) target = $region12
      $region11: #{tpu_custom_call.1} parent=5 // pred_region
        %s213 = ssub.s32 %s21, 1
        // Predicated region
        $region13: #{tpu_custom_call.1} parent=11 // pred_check
          %p214 = pneg %p68
        $region14: #{tpu_custom_call.1} parent=11 // pred_check_branch
          %216 = sbr.rel (%p214) target = $region16
        $region15: #{tpu_custom_call.1} parent=11 // pred_region
          %s218 = ssub.s32 2048, 2048
          %219 = vsyncadd [#allocation6], %s218
          %s220 = sshll.u32 [#allocation5], 4
          %s221 = int_to_ptr.vmem [resolvable:$true] %s220
          %226 = dma.hbm_to_vmem [thread:$0]  %s1, 2048, %s221, [#allocation6], 128, 128, 8
        $region16: #{tpu_custom_call.1} parent=11 // pred_fallthru
          _
        // Predicated region
        $region17: #{tpu_custom_call.1} parent=11 // pred_check
          %p227 = pneg %p89
        $region18: #{tpu_custom_call.1} parent=11 // pred_check_branch
          %229 = sbr.rel (%p227) target = $region20
        $region19: #{tpu_custom_call.1} parent=11 // pred_region
          _
        $region20: #{tpu_custom_call.1} parent=11 // pred_fallthru
          _
        // Predicated region
        $region21: #{tpu_custom_call.1} parent=11 // pred_check
          %p230 = pneg %p110
        $region22: #{tpu_custom_call.1} parent=11 // pred_check_branch
          %232 = sbr.rel (%p230) target = $region24
        $region23: #{tpu_custom_call.1} parent=11 // pred_region
          %s234 = ssub.s32 4096, 4096
          %235 = vsyncadd [#allocation6], %s234
          %s236 = sshll.u32 [#allocation7], 4
          %s237 = int_to_ptr.vmem [resolvable:$true] %s236
          %242 = dma.hbm_to_vmem [thread:$0]  %s3, 4096, %s237, [#allocation6], 128, 128, 8
        $region24: #{tpu_custom_call.1} parent=11 // pred_fallthru
          _
        // Predicated region
        $region25: #{tpu_custom_call.1} parent=11 // pred_check
          %p243 = pneg %p131
        $region26: #{tpu_custom_call.1} parent=11 // pred_check_branch
          %245 = sbr.rel (%p243) target = $region28
        $region27: #{tpu_custom_call.1} parent=11 // pred_region
          _
        $region28: #{tpu_custom_call.1} parent=11 // pred_fallthru
          _
        // Predicated region
        $region29: #{tpu_custom_call.1} parent=11 // pred_check
          %p246 = pneg %p152
        $region30: #{tpu_custom_call.1} parent=11 // pred_check_branch
          %248 = sbr.rel (%p246) target = $region32
        $region31: #{tpu_custom_call.1} parent=11 // pred_region
          %s250 = ssub.s32 2048, 2048
          %251 = vsyncadd [#allocation9], %s250
          %s252 = sshll.u32 [#allocation8], 4
          %s253 = int_to_ptr.vmem [resolvable:$true] %s252
          %258 = dma.hbm_to_vmem [thread:$0]  %s5, 2048, %s253, [#allocation9], 64, 64, 4
        $region32: #{tpu_custom_call.1} parent=11 // pred_fallthru
          _
        // Predicated region
        $region33: #{tpu_custom_call.1} parent=11 // pred_check
          %p259 = pneg %p173
        $region34: #{tpu_custom_call.1} parent=11 // pred_check_branch
          %261 = sbr.rel (%p259) target = $region36
        $region35: #{tpu_custom_call.1} parent=11 // pred_region
          _
        $region36: #{tpu_custom_call.1} parent=11 // pred_fallthru
          _
      $region12: #{tpu_custom_call.1} parent=5 // pred_fallthru
        _
      %p262 = scmp.lt.s32.totalorder %s21, 2
      // Predicated region
      $region37: #{tpu_custom_call.1} parent=5 // pred_check
        %p263 = pneg %p262
      $region38: #{tpu_custom_call.1} parent=5 // pred_check_branch
        %265 = sbr.rel (%p263) target = $region40
      $region39: #{tpu_custom_call.1} parent=5 // pred_region
        // Predicated region
        $region41: #{tpu_custom_call.1} parent=39 // pred_check
          %p266 = pneg %p41
        $region42: #{tpu_custom_call.1} parent=39 // pred_check_branch
          %268 = sbr.rel (%p266) target = $region44
        $region43: #{tpu_custom_call.1} parent=39 // pred_region
          %s269 = sand.u32 %s31, 1
          %s270 = scalar_lea.sflag [#allocation3], %s269
          %s271 = sand.u32 %s31, 1
          %s272 = smul.addr %s271, 8
          %s273 = scalar_lea.vmem [#allocation2], %s272
          %s275 = ssub.s32 128, 128
          %276 = vsyncadd %s270, %s275
          %s277 = smul.addr %s21, 4
          %s278 = sadd.s32 3, %s277
          %s279 = smul.addr %s278, 128
          %s280 = scalar_lea.hbm %s0, %s279
          %s282 = sshll.u32 %s273, 4
          %s283 = int_to_ptr.vmem [resolvable:$true] %s282
          %285 = dma.hbm_to_vmem [thread:$0]  %s280, 128, %s283, %s270
        $region44: #{tpu_custom_call.1} parent=39 // pred_fallthru
          _
      $region40: #{tpu_custom_call.1} parent=5 // pred_fallthru
        _
      %p286 = scmp.le.s32.totalorder 1, %s21
      %p287 = scmp.lt.s32.totalorder %s21, 3
      %p288 = pnand %p286, %p287
      %p289 = pneg %p288
      // Predicated region
      $region45: #{tpu_custom_call.1} parent=5 // pred_check
        _
      $region46: #{tpu_custom_call.1} parent=5 // pred_check_branch
        %291 = sbr.rel (%p288) target = $region48
      $region47: #{tpu_custom_call.1} parent=5 // pred_region
        %s292 = ssub.s32 %s21, 1
        %s293 = sand.u32 %s34, 1
        %s294 = scalar_lea.sflag [#allocation3], %s293
        %s295 = sand.u32 %s34, 1
        %s296 = smul.addr %s295, 8
        %s297 = scalar_lea.vmem [#allocation2], %s296
        // Predicated region
        $region49: #{tpu_custom_call.1} parent=47 // pred_check
          %p298 = pneg %p47
        $region50: #{tpu_custom_call.1} parent=47 // pred_check_branch
          %300 = sbr.rel (%p298) target = $region52
        $region51: #{tpu_custom_call.1} parent=47 // pred_region
          %301 = dma.done %s294, 128
        $region52: #{tpu_custom_call.1} parent=47 // pred_fallthru
          _
        // Predicated region
        $region53: #{tpu_custom_call.1} parent=47 // pred_check
          %p302 = pneg %p68
        $region54: #{tpu_custom_call.1} parent=47 // pred_check_branch
          %304 = sbr.rel (%p302) target = $region56
        $region55: #{tpu_custom_call.1} parent=47 // pred_region
          %305 = dma.done [#allocation6], 2048
        $region56: #{tpu_custom_call.1} parent=47 // pred_fallthru
          _
        // Predicated region
        $region57: #{tpu_custom_call.1} parent=47 // pred_check
          %p306 = pneg %p110
        $region58: #{tpu_custom_call.1} parent=47 // pred_check_branch
          %308 = sbr.rel (%p306) target = $region60
        $region59: #{tpu_custom_call.1} parent=47 // pred_region
          %309 = dma.done [#allocation6], 4096
        $region60: #{tpu_custom_call.1} parent=47 // pred_fallthru
          _
        // Predicated region
        $region61: #{tpu_custom_call.1} parent=47 // pred_check
          %p310 = pneg %p152
        $region62: #{tpu_custom_call.1} parent=47 // pred_check_branch
          %312 = sbr.rel (%p310) target = $region64
        $region63: #{tpu_custom_call.1} parent=47 // pred_region
          %313 = dma.done [#allocation9], 2048
        $region64: #{tpu_custom_call.1} parent=47 // pred_fallthru
          _
        %s314 = sand.u32 %s34, 1
        %s315 = scalar_lea.sflag [#allocation3], %s314
        %s316 = sand.u32 %s34, 1
        %s317 = smul.addr %s316, 8
        %s318 = scalar_lea.vmem [#allocation2], %s317
        %p319 = pneg %p47
        %p320 = pneg %p44
        %p321 = pneg %p68
        %p322 = pneg %p65
        %p323 = pneg %p89
        %p324 = pneg %p86
        %p325 = pneg %p110
        %p326 = pneg %p107
        %p327 = pneg %p131
        %p328 = pneg %p128
        %p329 = pneg %p152
        %p330 = pneg %p149
        %p331 = pneg %p173
        %p332 = pneg %p170
        %p333 = pneg %p199
        %p334 = pneg %p196
        %s335 = sand.u32 %s186, 1
        %s336 = scalar_lea.sflag [#allocation4], %s335
        %s337 = sand.u32 %s186, 1
        %s338 = smul.addr %s337, 16
        %s339 = scalar_lea.vmem [#allocation10], %s338
        %s340 = smul.u32 4, %s26
        %v342 = vld [vmem:[%s297] sm:$0xff]
        %v343 = vunpack.c.l.u8.bf16 %v342
        %v344 = vunpack.c.h.u8.bf16 %v342
        %v345 = vld [vmem:[#allocation5] sm:$0xff]
        %v346 = vld [vmem:[#allocation5 + $0x8] sm:$0xff]
        %v347 = vld [vmem:[#allocation5 + $0x10] sm:$0xff]
        %v348 = vld [vmem:[#allocation5 + $0x18] sm:$0xff]
        %v349 = vld [vmem:[#allocation5 + $0x20] sm:$0xff]
        %v350 = vld [vmem:[#allocation5 + $0x28] sm:$0xff]
        %v351 = vld [vmem:[#allocation5 + $0x30] sm:$0xff]
        %v352 = vld [vmem:[#allocation5 + $0x38] sm:$0xff]
        %v353 = vld [vmem:[#allocation5 + $0x40] sm:$0xff]
        %v354 = vld [vmem:[#allocation5 + $0x48] sm:$0xff]
        %v355 = vld [vmem:[#allocation5 + $0x50] sm:$0xff]
        %v356 = vld [vmem:[#allocation5 + $0x58] sm:$0xff]
        %v357 = vld [vmem:[#allocation5 + $0x60] sm:$0xff]
        %v358 = vld [vmem:[#allocation5 + $0x68] sm:$0xff]
        %v359 = vld [vmem:[#allocation5 + $0x70] sm:$0xff]
        %v360 = vld [vmem:[#allocation5 + $0x78] sm:$0xff]
        %v361 = vld [vmem:[%s2] sm:$0x3]
        %v363 = vlaneseq
        %v364 = vshrl.u32 %v363, 7
        %v365 = vsub.s32 0, %v364
        %v366 = vrot.slane %v361, %v365
        %v367 = vlaneseq
        %v368 = vshrl.u32 %v367, 7
        %v369 = vsub.s32 1, %v368
        %v370 = vrot.slane %v361, %v369
        %v389 = vunpack.c.l.b16 %v345
        %v390 = vunpack.c.h.b16 %v345
        %v391 = vunpack.c.l.b16 %v346
        %v392 = vunpack.c.h.b16 %v346
        %v393 = vunpack.c.l.b16 %v347
        %v394 = vunpack.c.h.b16 %v347
        %v395 = vunpack.c.l.b16 %v348
        %v396 = vunpack.c.h.b16 %v348
        %v397 = vunpack.c.l.b16 %v349
        %v398 = vunpack.c.h.b16 %v349
        %v399 = vunpack.c.l.b16 %v350
        %v400 = vunpack.c.h.b16 %v350
        %v401 = vunpack.c.l.b16 %v351
        %v402 = vunpack.c.h.b16 %v351
        %v403 = vunpack.c.l.b16 %v352
        %v404 = vunpack.c.h.b16 %v352
        %v405 = vunpack.c.l.b16 %v353
        %v406 = vunpack.c.h.b16 %v353
        %v407 = vunpack.c.l.b16 %v354
        %v408 = vunpack.c.h.b16 %v354
        %v409 = vunpack.c.l.b16 %v355
        %v410 = vunpack.c.h.b16 %v355
        %v411 = vunpack.c.l.b16 %v356
        %v412 = vunpack.c.h.b16 %v356
        %v413 = vunpack.c.l.b16 %v357
        %v414 = vunpack.c.h.b16 %v357
        %v415 = vunpack.c.l.b16 %v358
        %v416 = vunpack.c.h.b16 %v358
        %v417 = vunpack.c.l.b16 %v359
        %v418 = vunpack.c.h.b16 %v359
        %v419 = vunpack.c.l.b16 %v360
        %v420 = vunpack.c.h.b16 %v360
        %v421 = vpack.c.b16 %v391, %v389
        %v422 = vpack.c.b16 %v392, %v390
        %v423 = vpack.c.b16 %v395, %v393
        %v424 = vpack.c.b16 %v396, %v394
        %v425 = vpack.c.b16 %v399, %v397
        %v426 = vpack.c.b16 %v400, %v398
        %v427 = vpack.c.b16 %v403, %v401
        %v428 = vpack.c.b16 %v404, %v402
        %v429 = vpack.c.b16 %v407, %v405
        %v430 = vpack.c.b16 %v408, %v406
        %v431 = vpack.c.b16 %v411, %v409
        %v432 = vpack.c.b16 %v412, %v410
        %v433 = vpack.c.b16 %v415, %v413
        %v434 = vpack.c.b16 %v416, %v414
        %v435 = vpack.c.b16 %v419, %v417
        %v436 = vpack.c.b16 %v420, %v418
        %453 = vmatprep.subr.bf16.mxu0 %v436
        %454 = vmatpush1.bf16.msra.mxu0 %v435
        %455 = vmatprep.subr.bf16.mxu0 %v434
        %456 = vmatpush1.bf16.msra.mxu0 %v433
        %457 = vmatprep.subr.bf16.mxu0 %v432
        %458 = vmatpush1.bf16.msra.mxu0 %v431
        %459 = vmatprep.subr.bf16.mxu0 %v430
        %460 = vmatpush1.bf16.msra.mxu0 %v429
        %461 = vmatprep.subr.bf16.mxu0 %v428
        %462 = vmatpush1.bf16.msra.mxu0 %v427
        %463 = vmatprep.subr.bf16.mxu0 %v426
        %464 = vmatpush1.bf16.msra.mxu0 %v425
        %465 = vmatprep.subr.bf16.mxu0 %v424
        %466 = vmatpush1.bf16.msra.mxu0 %v423
        %467 = vmatprep.subr.bf16.mxu0 %v422
        %468 = vmatpush1.bf16.msra.mxu0 %v421
        %469 = vmatprep.subr.bf16.mxu0 0
        %470 = vmatpush2.bf16.msra.mxu0 0
        %471 = vmatprep.subr.bf16.mxu0 0
        %472 = vmatpush2.bf16.msra.mxu0 0
        %473 = vmatprep.subr.bf16.mxu0 0
        %474 = vmatpush2.bf16.msra.mxu0 0
        %475 = vmatprep.subr.bf16.mxu0 0
        %476 = vmatpush2.bf16.msra.mxu0 0
        %477 = vmatprep.subr.bf16.mxu0 0
        %478 = vmatpush2.bf16.msra.mxu0 0
        %479 = vmatprep.subr.bf16.mxu0 0
        %480 = vmatpush2.bf16.msra.mxu0 0
        %481 = vmatprep.subr.bf16.mxu0 0
        %482 = vmatpush2.bf16.msra.mxu0 0
        %483 = vmatprep.subr.bf16.mxu0 0
        %484 = vmatpush2.bf16.msra.mxu0 0
        %485 = vmatprep.mubr.bf16.mxu0 0
        %486 = vmatmul.mubr.bf16.gmra.mxu0 %v343
        %v487 = vpop.f32.mrf.mxu0
        %v488 = vadd.f32 %v366, %v487
        %v489 = vpop.f32.mrf.mxu0
        %v490 = vadd.f32 %v370, %v489
        %v491 = vpop.f32.mrf.mxu0
        %v492 = vadd.f32 %v366, %v491
        %v493 = vpop.f32.mrf.mxu0
        %v494 = vadd.f32 %v370, %v493
        %495 = vmatprep.mubr.bf16.mxu0 0
        %496 = vmatmul.mubr.bf16.gmra.mxu0 %v344
        %v497 = vpop.f32.mrf.mxu0
        %v498 = vadd.f32 %v366, %v497
        %v499 = vpop.f32.mrf.mxu0
        %v500 = vadd.f32 %v370, %v499
        %v501 = vpop.f32.mrf.mxu0
        %v502 = vadd.f32 %v366, %v501
        %v503 = vpop.f32.mrf.mxu0
        %v504 = vadd.f32 %v370, %v503
        %505 = vdwg.mxu0
        %v506 = vmax.f32 %v488, 0.0
        %v507 = vmax.f32 %v490, 0.0
        %v508 = vmax.f32 %v492, 0.0
        %v509 = vmax.f32 %v494, 0.0
        %v510 = vmax.f32 %v498, 0.0
        %v511 = vmax.f32 %v500, 0.0
        %v512 = vmax.f32 %v502, 0.0
        %v513 = vmax.f32 %v504, 0.0
        %v514 = vpack.c.bf16 %v508, %v506
        %v515 = vpack.c.bf16 %v509, %v507
        %v516 = vpack.c.bf16 %v512, %v510
        %v517 = vpack.c.bf16 %v513, %v511
        %v518 = vld [vmem:[#allocation7] sm:$0xff]
        %v519 = vld [vmem:[#allocation7 + $0x8] sm:$0xff]
        %v520 = vld [vmem:[#allocation7 + $0x10] sm:$0xff]
        %v521 = vld [vmem:[#allocation7 + $0x18] sm:$0xff]
        %v522 = vld [vmem:[#allocation7 + $0x20] sm:$0xff]
        %v523 = vld [vmem:[#allocation7 + $0x28] sm:$0xff]
        %v524 = vld [vmem:[#allocation7 + $0x30] sm:$0xff]
        %v525 = vld [vmem:[#allocation7 + $0x38] sm:$0xff]
        %v526 = vld [vmem:[#allocation7 + $0x40] sm:$0xff]
        %v527 = vld [vmem:[#allocation7 + $0x48] sm:$0xff]
        %v528 = vld [vmem:[#allocation7 + $0x50] sm:$0xff]
        %v529 = vld [vmem:[#allocation7 + $0x58] sm:$0xff]
        %v530 = vld [vmem:[#allocation7 + $0x60] sm:$0xff]
        %v531 = vld [vmem:[#allocation7 + $0x68] sm:$0xff]
        %v532 = vld [vmem:[#allocation7 + $0x70] sm:$0xff]
        %v533 = vld [vmem:[#allocation7 + $0x78] sm:$0xff]
        %v534 = vld [vmem:[#allocation7 + $0x80] sm:$0xff]
        %v535 = vld [vmem:[#allocation7 + $0x88] sm:$0xff]
        %v536 = vld [vmem:[#allocation7 + $0x90] sm:$0xff]
        %v537 = vld [vmem:[#allocation7 + $0x98] sm:$0xff]
        %v538 = vld [vmem:[#allocation7 + $0xa0] sm:$0xff]
        %v539 = vld [vmem:[#allocation7 + $0xa8] sm:$0xff]
        %v540 = vld [vmem:[#allocation7 + $0xb0] sm:$0xff]
        %v541 = vld [vmem:[#allocation7 + $0xb8] sm:$0xff]
        %v542 = vld [vmem:[#allocation7 + $0xc0] sm:$0xff]
        %v543 = vld [vmem:[#allocation7 + $0xc8] sm:$0xff]
        %v544 = vld [vmem:[#allocation7 + $0xd0] sm:$0xff]
        %v545 = vld [vmem:[#allocation7 + $0xd8] sm:$0xff]
        %v546 = vld [vmem:[#allocation7 + $0xe0] sm:$0xff]
        %v547 = vld [vmem:[#allocation7 + $0xe8] sm:$0xff]
        %v548 = vld [vmem:[#allocation7 + $0xf0] sm:$0xff]
        %v549 = vld [vmem:[#allocation7 + $0xf8] sm:$0xff]
        %v550 = vld [vmem:[%s4] sm:$0x3]
        %v552 = vlaneseq
        %v553 = vshrl.u32 %v552, 7
        %v554 = vsub.s32 0, %v553
        %v555 = vrot.slane %v550, %v554
        %v556 = vlaneseq
        %v557 = vshrl.u32 %v556, 7
        %v558 = vsub.s32 1, %v557
        %v559 = vrot.slane %v550, %v558
        %v594 = vunpack.c.l.b16 %v518
        %v595 = vunpack.c.h.b16 %v518
        %v596 = vunpack.c.l.b16 %v519
        %v597 = vunpack.c.h.b16 %v519
        %v598 = vunpack.c.l.b16 %v520
        %v599 = vunpack.c.h.b16 %v520
        %v600 = vunpack.c.l.b16 %v521
        %v601 = vunpack.c.h.b16 %v521
        %v602 = vunpack.c.l.b16 %v522
        %v603 = vunpack.c.h.b16 %v522
        %v604 = vunpack.c.l.b16 %v523
        %v605 = vunpack.c.h.b16 %v523
        %v606 = vunpack.c.l.b16 %v524
        %v607 = vunpack.c.h.b16 %v524
        %v608 = vunpack.c.l.b16 %v525
        %v609 = vunpack.c.h.b16 %v525
        %v610 = vunpack.c.l.b16 %v526
        %v611 = vunpack.c.h.b16 %v526
        %v612 = vunpack.c.l.b16 %v527
        %v613 = vunpack.c.h.b16 %v527
        %v614 = vunpack.c.l.b16 %v528
        %v615 = vunpack.c.h.b16 %v528
        %v616 = vunpack.c.l.b16 %v529
        %v617 = vunpack.c.h.b16 %v529
        %v618 = vunpack.c.l.b16 %v530
        %v619 = vunpack.c.h.b16 %v530
        %v620 = vunpack.c.l.b16 %v531
        %v621 = vunpack.c.h.b16 %v531
        %v622 = vunpack.c.l.b16 %v532
        %v623 = vunpack.c.h.b16 %v532
        %v624 = vunpack.c.l.b16 %v533
        %v625 = vunpack.c.h.b16 %v533
        %v626 = vunpack.c.l.b16 %v534
        %v627 = vunpack.c.h.b16 %v534
        %v628 = vunpack.c.l.b16 %v535
        %v629 = vunpack.c.h.b16 %v535
        %v630 = vunpack.c.l.b16 %v536
        %v631 = vunpack.c.h.b16 %v536
        %v632 = vunpack.c.l.b16 %v537
        %v633 = vunpack.c.h.b16 %v537
        %v634 = vunpack.c.l.b16 %v538
        %v635 = vunpack.c.h.b16 %v538
        %v636 = vunpack.c.l.b16 %v539
        %v637 = vunpack.c.h.b16 %v539
        %v638 = vunpack.c.l.b16 %v540
        %v639 = vunpack.c.h.b16 %v540
        %v640 = vunpack.c.l.b16 %v541
        %v641 = vunpack.c.h.b16 %v541
        %v642 = vunpack.c.l.b16 %v542
        %v643 = vunpack.c.h.b16 %v542
        %v644 = vunpack.c.l.b16 %v543
        %v645 = vunpack.c.h.b16 %v543
        %v646 = vunpack.c.l.b16 %v544
        %v647 = vunpack.c.h.b16 %v544
        %v648 = vunpack.c.l.b16 %v545
        %v649 = vunpack.c.h.b16 %v545
        %v650 = vunpack.c.l.b16 %v546
        %v651 = vunpack.c.h.b16 %v546
        %v652 = vunpack.c.l.b16 %v547
        %v653 = vunpack.c.h.b16 %v547
        %v654 = vunpack.c.l.b16 %v548
        %v655 = vunpack.c.h.b16 %v548
        %v656 = vunpack.c.l.b16 %v549
        %v657 = vunpack.c.h.b16 %v549
        %v658 = vpack.c.b16 %v596, %v594
        %v659 = vpack.c.b16 %v597, %v595
        %v660 = vpack.c.b16 %v600, %v598
        %v661 = vpack.c.b16 %v601, %v599
        %v662 = vpack.c.b16 %v604, %v602
        %v663 = vpack.c.b16 %v605, %v603
        %v664 = vpack.c.b16 %v608, %v606
        %v665 = vpack.c.b16 %v609, %v607
        %v666 = vpack.c.b16 %v612, %v610
        %v667 = vpack.c.b16 %v613, %v611
        %v668 = vpack.c.b16 %v616, %v614
        %v669 = vpack.c.b16 %v617, %v615
        %v670 = vpack.c.b16 %v620, %v618
        %v671 = vpack.c.b16 %v621, %v619
        %v672 = vpack.c.b16 %v624, %v622
        %v673 = vpack.c.b16 %v625, %v623
        %v674 = vpack.c.b16 %v628, %v626
        %v675 = vpack.c.b16 %v629, %v627
        %v676 = vpack.c.b16 %v632, %v630
        %v677 = vpack.c.b16 %v633, %v631
        %v678 = vpack.c.b16 %v636, %v634
        %v679 = vpack.c.b16 %v637, %v635
        %v680 = vpack.c.b16 %v640, %v638
        %v681 = vpack.c.b16 %v641, %v639
        %v682 = vpack.c.b16 %v644, %v642
        %v683 = vpack.c.b16 %v645, %v643
        %v684 = vpack.c.b16 %v648, %v646
        %v685 = vpack.c.b16 %v649, %v647
        %v686 = vpack.c.b16 %v652, %v650
        %v687 = vpack.c.b16 %v653, %v651
        %v688 = vpack.c.b16 %v656, %v654
        %v689 = vpack.c.b16 %v657, %v655
        %722 = vmatprep.subr.bf16.mxu0 %v673
        %723 = vmatpush1.bf16.msra.mxu0 %v672
        %724 = vmatprep.subr.bf16.mxu0 %v671
        %725 = vmatpush1.bf16.msra.mxu0 %v670
        %726 = vmatprep.subr.bf16.mxu0 %v669
        %727 = vmatpush1.bf16.msra.mxu0 %v668
        %728 = vmatprep.subr.bf16.mxu0 %v667
        %729 = vmatpush1.bf16.msra.mxu0 %v666
        %730 = vmatprep.subr.bf16.mxu0 %v665
        %731 = vmatpush1.bf16.msra.mxu0 %v664
        %732 = vmatprep.subr.bf16.mxu0 %v663
        %733 = vmatpush1.bf16.msra.mxu0 %v662
        %734 = vmatprep.subr.bf16.mxu0 %v661
        %735 = vmatpush1.bf16.msra.mxu0 %v660
        %736 = vmatprep.subr.bf16.mxu0 %v659
        %737 = vmatpush1.bf16.msra.mxu0 %v658
        %738 = vmatprep.subr.bf16.mxu0 %v689
        %739 = vmatpush2.bf16.msra.mxu0 %v688
        %740 = vmatprep.subr.bf16.mxu0 %v687
        %741 = vmatpush2.bf16.msra.mxu0 %v686
        %742 = vmatprep.subr.bf16.mxu0 %v685
        %743 = vmatpush2.bf16.msra.mxu0 %v684
        %744 = vmatprep.subr.bf16.mxu0 %v683
        %745 = vmatpush2.bf16.msra.mxu0 %v682
        %746 = vmatprep.subr.bf16.mxu0 %v681
        %747 = vmatpush2.bf16.msra.mxu0 %v680
        %748 = vmatprep.subr.bf16.mxu0 %v679
        %749 = vmatpush2.bf16.msra.mxu0 %v678
        %750 = vmatprep.subr.bf16.mxu0 %v677
        %751 = vmatpush2.bf16.msra.mxu0 %v676
        %752 = vmatprep.subr.bf16.mxu0 %v675
        %753 = vmatpush2.bf16.msra.mxu0 %v674
        %754 = vmatprep.mubr.bf16.mxu0 %v515
        %755 = vmatmul.mubr.bf16.gmra.mxu0 %v514
        %v756 = vpop.f32.mrf.mxu0
        %v757 = vadd.f32 %v555, %v756
        %v758 = vpop.f32.mrf.mxu0
        %v759 = vadd.f32 %v559, %v758
        %v760 = vpop.f32.mrf.mxu0
        %v761 = vadd.f32 %v555, %v760
        %v762 = vpop.f32.mrf.mxu0
        %v763 = vadd.f32 %v559, %v762
        %764 = vmatprep.mubr.bf16.mxu0 %v517
        %765 = vmatmul.mubr.bf16.gmra.mxu0 %v516
        %v766 = vpop.f32.mrf.mxu0
        %v767 = vadd.f32 %v555, %v766
        %v768 = vpop.f32.mrf.mxu0
        %v769 = vadd.f32 %v559, %v768
        %v770 = vpop.f32.mrf.mxu0
        %v771 = vadd.f32 %v555, %v770
        %v772 = vpop.f32.mrf.mxu0
        %v773 = vadd.f32 %v559, %v772
        %774 = vdwg.mxu0
        %v775 = vmax.f32 %v757, 0.0
        %v776 = vmax.f32 %v759, 0.0
        %v777 = vmax.f32 %v761, 0.0
        %v778 = vmax.f32 %v763, 0.0
        %v779 = vmax.f32 %v767, 0.0
        %v780 = vmax.f32 %v769, 0.0
        %v781 = vmax.f32 %v771, 0.0
        %v782 = vmax.f32 %v773, 0.0
        %v783 = vpack.c.bf16 %v777, %v775
        %v784 = vpack.c.bf16 %v778, %v776
        %v785 = vpack.c.bf16 %v781, %v779
        %v786 = vpack.c.bf16 %v782, %v780
        %v787 = vld [vmem:[#allocation8] sm:$0xf]
        %v788 = vld [vmem:[#allocation8 + $0x4] sm:$0xf]
        %v789 = vld [vmem:[#allocation8 + $0x8] sm:$0xf]
        %v790 = vld [vmem:[#allocation8 + $0xc] sm:$0xf]
        %v791 = vld [vmem:[#allocation8 + $0x10] sm:$0xf]
        %v792 = vld [vmem:[#allocation8 + $0x14] sm:$0xf]
        %v793 = vld [vmem:[#allocation8 + $0x18] sm:$0xf]
        %v794 = vld [vmem:[#allocation8 + $0x1c] sm:$0xf]
        %v795 = vld [vmem:[#allocation8 + $0x20] sm:$0xf]
        %v796 = vld [vmem:[#allocation8 + $0x24] sm:$0xf]
        %v797 = vld [vmem:[#allocation8 + $0x28] sm:$0xf]
        %v798 = vld [vmem:[#allocation8 + $0x2c] sm:$0xf]
        %v799 = vld [vmem:[#allocation8 + $0x30] sm:$0xf]
        %v800 = vld [vmem:[#allocation8 + $0x34] sm:$0xf]
        %v801 = vld [vmem:[#allocation8 + $0x38] sm:$0xf]
        %v802 = vld [vmem:[#allocation8 + $0x3c] sm:$0xf]
        %v803 = vld [vmem:[#allocation8 + $0x40] sm:$0xf]
        %v804 = vld [vmem:[#allocation8 + $0x44] sm:$0xf]
        %v805 = vld [vmem:[#allocation8 + $0x48] sm:$0xf]
        %v806 = vld [vmem:[#allocation8 + $0x4c] sm:$0xf]
        %v807 = vld [vmem:[#allocation8 + $0x50] sm:$0xf]
        %v808 = vld [vmem:[#allocation8 + $0x54] sm:$0xf]
        %v809 = vld [vmem:[#allocation8 + $0x58] sm:$0xf]
        %v810 = vld [vmem:[#allocation8 + $0x5c] sm:$0xf]
        %v811 = vld [vmem:[#allocation8 + $0x60] sm:$0xf]
        %v812 = vld [vmem:[#allocation8 + $0x64] sm:$0xf]
        %v813 = vld [vmem:[#allocation8 + $0x68] sm:$0xf]
        %v814 = vld [vmem:[#allocation8 + $0x6c] sm:$0xf]
        %v815 = vld [vmem:[#allocation8 + $0x70] sm:$0xf]
        %v816 = vld [vmem:[#allocation8 + $0x74] sm:$0xf]
        %v817 = vld [vmem:[#allocation8 + $0x78] sm:$0xf]
        %v818 = vld [vmem:[#allocation8 + $0x7c] sm:$0xf]
        %v819 = vld [vmem:[%s6] sm:$0x1]
        %v821 = vlaneseq
        %v822 = vshrl.u32 %v821, 7
        %v823 = vsub.s32 0, %v822
        %v824 = vrot.slane %v819, %v823
        %v858 = vunpack.c.l.b16 %v787
        %v859 = vunpack.c.l.b16 %v788
        %v860 = vunpack.c.l.b16 %v789
        %v861 = vunpack.c.l.b16 %v790
        %v862 = vunpack.c.l.b16 %v791
        %v863 = vunpack.c.l.b16 %v792
        %v864 = vunpack.c.l.b16 %v793
        %v865 = vunpack.c.l.b16 %v794
        %v866 = vunpack.c.l.b16 %v795
        %v867 = vunpack.c.l.b16 %v796
        %v868 = vunpack.c.l.b16 %v797
        %v869 = vunpack.c.l.b16 %v798
        %v870 = vunpack.c.l.b16 %v799
        %v871 = vunpack.c.l.b16 %v800
        %v872 = vunpack.c.l.b16 %v801
        %v873 = vunpack.c.l.b16 %v802
        %v874 = vunpack.c.l.b16 %v803
        %v875 = vunpack.c.l.b16 %v804
        %v876 = vunpack.c.l.b16 %v805
        %v877 = vunpack.c.l.b16 %v806
        %v878 = vunpack.c.l.b16 %v807
        %v879 = vunpack.c.l.b16 %v808
        %v880 = vunpack.c.l.b16 %v809
        %v881 = vunpack.c.l.b16 %v810
        %v882 = vunpack.c.l.b16 %v811
        %v883 = vunpack.c.l.b16 %v812
        %v884 = vunpack.c.l.b16 %v813
        %v885 = vunpack.c.l.b16 %v814
        %v886 = vunpack.c.l.b16 %v815
        %v887 = vunpack.c.l.b16 %v816
        %v888 = vunpack.c.l.b16 %v817
        %v889 = vunpack.c.l.b16 %v818
        %v890 = vpack.c.b16 %v859, %v858
        %v891 = vpack.c.b16 %v861, %v860
        %v892 = vpack.c.b16 %v863, %v862
        %v893 = vpack.c.b16 %v865, %v864
        %v894 = vpack.c.b16 %v867, %v866
        %v895 = vpack.c.b16 %v869, %v868
        %v896 = vpack.c.b16 %v871, %v870
        %v897 = vpack.c.b16 %v873, %v872
        %v898 = vpack.c.b16 %v875, %v874
        %v899 = vpack.c.b16 %v877, %v876
        %v900 = vpack.c.b16 %v879, %v878
        %v901 = vpack.c.b16 %v881, %v880
        %v902 = vpack.c.b16 %v883, %v882
        %v903 = vpack.c.b16 %v885, %v884
        %v904 = vpack.c.b16 %v887, %v886
        %v905 = vpack.c.b16 %v889, %v888
        %922 = vmatprep.subr.bf16.mxu0 0
        %923 = vmatpush1.bf16.msra.mxu0 %v897
        %924 = vmatprep.subr.bf16.mxu0 0
        %925 = vmatpush1.bf16.msra.mxu0 %v896
        %926 = vmatprep.subr.bf16.mxu0 0
        %927 = vmatpush1.bf16.msra.mxu0 %v895
        %928 = vmatprep.subr.bf16.mxu0 0
        %929 = vmatpush1.bf16.msra.mxu0 %v894
        %930 = vmatprep.subr.bf16.mxu0 0
        %931 = vmatpush1.bf16.msra.mxu0 %v893
        %932 = vmatprep.subr.bf16.mxu0 0
        %933 = vmatpush1.bf16.msra.mxu0 %v892
        %934 = vmatprep.subr.bf16.mxu0 0
        %935 = vmatpush1.bf16.msra.mxu0 %v891
        %936 = vmatprep.subr.bf16.mxu0 0
        %937 = vmatpush1.bf16.msra.mxu0 %v890
        %938 = vmatprep.subr.bf16.mxu0 0
        %939 = vmatpush2.bf16.msra.mxu0 %v905
        %940 = vmatprep.subr.bf16.mxu0 0
        %941 = vmatpush2.bf16.msra.mxu0 %v904
        %942 = vmatprep.subr.bf16.mxu0 0
        %943 = vmatpush2.bf16.msra.mxu0 %v903
        %944 = vmatprep.subr.bf16.mxu0 0
        %945 = vmatpush2.bf16.msra.mxu0 %v902
        %946 = vmatprep.subr.bf16.mxu0 0
        %947 = vmatpush2.bf16.msra.mxu0 %v901
        %948 = vmatprep.subr.bf16.mxu0 0
        %949 = vmatpush2.bf16.msra.mxu0 %v900
        %950 = vmatprep.subr.bf16.mxu0 0
        %951 = vmatpush2.bf16.msra.mxu0 %v899
        %952 = vmatprep.subr.bf16.mxu0 0
        %953 = vmatpush2.bf16.msra.mxu0 %v898
        %954 = vmatprep.mubr.bf16.mxu0 %v784
        %955 = vmatmul.mubr.bf16.gmra.mxu0 %v783
        %v956 = vpop.f32.mrf.mxu0
        %v957 = vadd.f32 %v824, %v956
        %v958 = vpop.f32.mrf.mxu0
        %v959 = vpop.f32.mrf.mxu0
        %v960 = vadd.f32 %v824, %v959
        %v961 = vpop.f32.mrf.mxu0
        %962 = vmatprep.mubr.bf16.mxu0 %v786
        %963 = vmatmul.mubr.bf16.gmra.mxu0 %v785
        %v964 = vpop.f32.mrf.mxu0
        %v965 = vadd.f32 %v824, %v964
        %v966 = vpop.f32.mrf.mxu0
        %v967 = vpop.f32.mrf.mxu0
        %v968 = vadd.f32 %v824, %v967
        %v969 = vpop.f32.mrf.mxu0
        %970 = vdwg.mxu0
        %v971 = vpack.c.bf16 %v960, %v957
        %v972 = vpack.c.bf16 %v968, %v965
        %v975 = vunpack.c.l.b16 %v971
        %v976 = vunpack.c.h.b16 %v971
        %v977 = vunpack.c.l.b16 %v972
        %v978 = vunpack.c.h.b16 %v972
        %v979 = vpack.c.b16 %v975, %v975
        %v980 = vpack.c.b16 %v976, %v976
        %v981 = vpack.c.b16 %v977, %v977
        %v982 = vpack.c.b16 %v978, %v978
        %987 = vst [vmem:[%s339] sm:$0xf] %v979
        %988 = vst [vmem:[%s339 + $0x4] sm:$0xf] %v980
        %989 = vst [vmem:[%s339 + $0x8] sm:$0xf] %v981
        %990 = vst [vmem:[%s339 + $0xc] sm:$0xf] %v982
        %s991 = sand.u32 %s186, 1
        %s992 = scalar_lea.sflag [#allocation4], %s991
        %s993 = sand.u32 %s186, 1
        %s994 = smul.addr %s993, 16
        %s995 = scalar_lea.vmem [#allocation10], %s994
        // Predicated region
        $region65: #{tpu_custom_call.1} parent=47 // pred_check
          %p996 = pneg %p196
        $region66: #{tpu_custom_call.1} parent=47 // pred_check_branch
          %998 = sbr.rel (%p996) target = $region68
        $region67: #{tpu_custom_call.1} parent=47 // pred_region
          %s999 = smul.u32 4, %s26
          %s1001 = ssub.s32 256, 256
          %1002 = vsyncadd %s992, %s1001
          %s1003 = smul.addr %s999, 64
          %s1004 = scalar_lea.hbm %s7, %s1003
          %s1005 = sshll.u32 %s995, 4
          %s1006 = int_to_ptr.vmem [resolvable:$true] %s1005
          %1011 = dma.vmem_to_hbm [thread:$0]  %s1006, 256, %s1004, %s992, 64, 64, 4
        $region68: #{tpu_custom_call.1} parent=47 // pred_fallthru
          _
      $region48: #{tpu_custom_call.1} parent=5 // pred_fallthru
        _
      %p1012 = scmp.le.s32.totalorder 2, %s21
      // Predicated region
      $region69: #{tpu_custom_call.1} parent=5 // pred_check
        %p1013 = pneg %p1012
      $region70: #{tpu_custom_call.1} parent=5 // pred_check_branch
        %1015 = sbr.rel (%p1013) target = $region72
      $region71: #{tpu_custom_call.1} parent=5 // pred_region
        %s1016 = ssub.s32 %s21, 2
        // Predicated region
        $region73: #{tpu_custom_call.1} parent=71 // pred_check
          %p1017 = pneg %p202
        $region74: #{tpu_custom_call.1} parent=71 // pred_check_branch
          %1019 = sbr.rel (%p1017) target = $region76
        $region75: #{tpu_custom_call.1} parent=71 // pred_region
          %s1020 = sand.u32 %s187, 1
          %s1021 = scalar_lea.sflag [#allocation4], %s1020
          %s1022 = sand.u32 %s187, 1
          %s1023 = smul.addr %s1022, 16
          %s1024 = scalar_lea.vmem [#allocation10], %s1023
          %1025 = dma.done %s1021, 256
        $region76: #{tpu_custom_call.1} parent=71 // pred_fallthru
          _
      $region72: #{tpu_custom_call.1} parent=5 // pred_fallthru
        _
    $region6: #{tpu_custom_call.1} parent=1 // loop_footer
      %s25 = sadd.s32 1, %s21
    $region7: #{tpu_custom_call.1} parent=1 // loop_footer_branch
      %20 = sbr.rel target = $region3
    $region8: #{tpu_custom_call.1} parent=1 // loop_exit
      _
    %1026 = vsyncpa [#allocation3], 1
    %s1027 = scalar_lea.sflag [#allocation3], 1
    %1028 = vsyncpa %s1027, 1
    %1029 = vsyncpa [#allocation6], 1
    %1030 = vsyncpa [#allocation9], 1
    %1031 = vsyncpa [#allocation4], 1
    %s1032 = scalar_lea.sflag [#allocation4], 1
    %1033 = vsyncpa %s1032, 1

</llo_original>
